<compile_context>
chip_gen: v5e
topology: v5e:2x2
jax: 0.10.0
libtpu: 0.0.40
codegen_flags: <defaults>
</compile_context>

<pallas_src>
import functools

import jax
import jax.numpy as jnp
from jax.experimental import pallas as pl
from jax.experimental.pallas import tpu as pltpu

STATE_SIZE = 3     # Pendulum-v0 observation dim
ACTION_SIZE = 1    # Pendulum-v0 action dim
HIDDEN_SIZE = 64   # per-critic hidden; fused hidden = 128 = one lane width
BATCH = 8


def _align8(n):
    return ((n + 7) // 8) * 8


# --------------------------------------------------------------------------
# Parameters (PyTorch-style) and one-time fused packing
# --------------------------------------------------------------------------
def init_params(key, state_size=STATE_SIZE, action_size=ACTION_SIZE,
                hidden_size=HIDDEN_SIZE):
    """Deterministic synthetic parameters, PyTorch layout: W (out, in), b (out,)."""
    in_dim = state_size + action_size
    shapes = [
        ("w11", (hidden_size, in_dim)), ("b11", (hidden_size,)),
        ("w12", (hidden_size, hidden_size)), ("b12", (hidden_size,)),
        ("w1o", (1, hidden_size)), ("b1o", (1,)),
        ("w21", (hidden_size, in_dim)), ("b21", (hidden_size,)),
        ("w22", (hidden_size, hidden_size)), ("b22", (hidden_size,)),
        ("w2o", (1, hidden_size)), ("b2o", (1,)),
    ]
    params = {}
    keys = jax.random.split(key, len(shapes))
    for (name, shape), k in zip(shapes, keys):
        fan_in = shape[-1] if len(shape) > 1 else 1
        bound = 1.0 / jnp.sqrt(jnp.float32(fan_in))
        params[name] = jax.random.uniform(
            k, shape, dtype=jnp.float32, minval=-bound, maxval=bound)
    return params


def pack_params(params, state_size=STATE_SIZE, action_size=ACTION_SIZE,
                hidden_size=HIDDEN_SIZE):
    """Fuse + pre-transpose the twin-critic weights into one VMEM slab.

    Called ONCE at init time (not per forward).  Returns (slab, offsets);
    offsets are static row offsets of each section, all multiples of 8 so
    every in-kernel slice is sublane-aligned.

    Slab layout (all 2H = 128 lanes wide):
      w1s : (state_size, 2H)   layer-1 weights for the state columns
      w1a : (action_size, 2H)  layer-1 weights for the action column(s)
      b1  : (1, 2H)
      w2  : (2H, 2H)           block-diagonal [[w12.T, 0], [0, w22.T]]
      b2  : (1, 2H)
      wo  : (2H, 2H)           lane 0 = w1o, lane 1 = w2o, rest zero
      bo  : (1, 2H)            lane 0 = b1o, lane 1 = b2o, rest zero
    """
    H, H2 = hidden_size, 2 * hidden_size
    f32 = jnp.float32

    w1 = jnp.concatenate([params["w11"].T, params["w21"].T], axis=1)  # (in, 2H)
    w1s, w1a = w1[:state_size], w1[state_size:]
    b1 = jnp.concatenate([params["b11"], params["b21"]])[None, :]

    z = jnp.zeros((H, H), f32)
    w2 = jnp.concatenate([
        jnp.concatenate([params["w12"].T, z], axis=1),
        jnp.concatenate([z, params["w22"].T], axis=1)], axis=0)       # (2H, 2H)
    b2 = jnp.concatenate([params["b12"], params["b22"]])[None, :]

    wo = jnp.zeros((H2, H2), f32)
    wo = wo.at[:H, 0].set(params["w1o"][0]).at[H:, 1].set(params["w2o"][0])
    bo = jnp.zeros((1, H2), f32)
    bo = bo.at[0, 0].set(params["b1o"][0]).at[0, 1].set(params["b2o"][0])

    sections = [w1s, w1a, b1, w2, b2, wo, bo]
    offsets, padded, row = [], [], 0
    for s in sections:
        offsets.append(row)
        rows = _align8(s.shape[0])
        padded.append(jnp.pad(s.astype(f32), ((0, rows - s.shape[0]), (0, 0))))
        row += rows
    slab = jnp.concatenate(padded, axis=0)   # (296, 128) for this config
    return slab, tuple(offsets)


# --------------------------------------------------------------------------
# Kernel
# --------------------------------------------------------------------------
def _make_kernel(state_size, action_size, hidden_size, offs):
    H2 = 2 * hidden_size
    in_dim = state_size + action_size
    o_w1s, o_w1a, o_b1, o_w2, o_b2, o_wo, o_bo = offs

    def kernel(x_ref, a_ref, slab_ref, q_ref):
        # clamp(state, -1.1, 1.1); action is NOT clamped (matches the module).
        x = jnp.clip(x_ref[...], -1.1, 1.1)
        a = a_ref[...]

        # Static, sublane-aligned views into the packed parameter slab.
        w1s = slab_ref[o_w1s:o_w1s + state_size, :]
        w1a = slab_ref[o_w1a:o_w1a + action_size, :]
        b1 = slab_ref[o_b1:o_b1 + 1, :]
        w2 = slab_ref[o_w2:o_w2 + H2, :]
        b2 = slab_ref[o_b2:o_b2 + 1, :]
        wo = slab_ref[o_wo:o_wo + H2, :]
        bo = slab_ref[o_bo:o_bo + 1, :]

        # Fused layer 1, concat-free: [clip(x) | a] @ W1 == x@W1[:S] + a@W1[S:].
        if in_dim <= 16:
            # K is far too short to fill the MXU's systolic depth; do it as
            # in_dim rank-1 FMAs on the VPU (keeps the MXU free for layer 2).
            h = b1 + x[:, 0:1] * w1s[0:1, :]
            for j in range(1, state_size):
                h = h + x[:, j:j + 1] * w1s[j:j + 1, :]
            for j in range(action_size):
                h = h + a[:, j:j + 1] * w1a[j:j + 1, :]
        else:
            h = jnp.dot(x, w1s, preferred_element_type=jnp.float32)
            h = h + jnp.dot(a, w1a, preferred_element_type=jnp.float32)
            h = h + b1
        h = jnp.maximum(h, 0.0)

        # Fused layer 2: block-diagonal (2H, 2H) keeps the two critics separate.
        h = jnp.maximum(
            jnp.dot(h, w2, preferred_element_type=jnp.float32) + b2, 0.0)

        # Fused output head, lane-dense store: lane 0 = q1, lane 1 = q2,
        # lanes 2..127 are exact zeros (zero weight columns + zero bias).
        q = jnp.dot(h, wo, preferred_element_type=jnp.float32) + bo
        q_ref[...] = q.astype(q_ref.dtype)

    return kernel


def _choose_tile(batch, max_block_b):
    """Pick (tile_rows, padded_batch).

    For B >= 16 always produce >= 2 grid steps so the "parallel" grid axis can
    shard across v7x's two TensorCores; cap at max_block_b (multiple of 8).
    """
    if batch < 16:
        return batch, batch                      # single full-array block
    tb = min(max_block_b, _align8(-(-batch // 2)))
    bp = -(-batch // tb) * tb
    return tb, bp


def critic_net_forward(x, a, slab, *, offs, max_block_b=1024):
    """Fused twin-critic forward. Returns (q1, q2), each (B, 1)."""
    B, state_size = x.shape
    action_size = a.shape[1]
    hidden_size = slab.shape[1] // 2
    H2 = slab.shape[1]

    tb, Bp = _choose_tile(B, max_block_b)
    if Bp != B:
        x = jnp.pad(x, ((0, Bp - B), (0, 0)))
        a = jnp.pad(a, ((0, Bp - B), (0, 0)))

    kernel = _make_kernel(state_size, action_size, hidden_size, offs)

    q = pl.pallas_call(
        kernel,
        # Lane-dense (Bp, 128) output -> unmasked vector stores + one wide DMA.
        out_shape=jax.ShapeDtypeStruct((Bp, H2), jnp.float32),
        grid=(Bp // tb,),
        in_specs=[
            pl.BlockSpec((tb, state_size), lambda i: (i, 0)),
            pl.BlockSpec((tb, action_size), lambda i: (i, 0)),
            # Weights: full slab, constant index map -> resident in VMEM;
            # single-buffered because it is never re-fetched.
            pl.BlockSpec(slab.shape, lambda i: (0, 0),
                         pipeline_mode=pl.Buffered(1)),
        ],
        out_specs=pl.BlockSpec((tb, H2), lambda i: (i, 0)),
        compiler_params=pltpu.CompilerParams(
            dimension_semantics=("parallel",)),
    )(x, a, slab)

    return q[:B, 0:1], q[:B, 1:2]


# --------------------------------------------------------------------------
# Pure-JAX reference (matches the PyTorch forward exactly)
# --------------------------------------------------------------------------
def critic_net_reference(x, a, params):
    x = jnp.clip(x, -1.1, 1.1)
    xa = jnp.concatenate([x, a], axis=1)

    def lin(h, w, b):
        return h @ w.T + b

    h1 = jax.nn.relu(lin(xa, params["w11"], params["b11"]))
    h1 = jax.nn.relu(lin(h1, params["w12"], params["b12"]))
    q1 = lin(h1, params["w1o"], params["b1o"])

    h2 = jax.nn.relu(lin(xa, params["w21"], params["b21"]))
    h2 = jax.nn.relu(lin(h2, params["w22"], params["b22"]))
    q2 = lin(h2, params["w2o"], params["b2o"])
    return q1, q2


if __name__ == "__main__":
    key = jax.random.PRNGKey(0)
    k_params, k_x, k_a = jax.random.split(key, 3)

    params = init_params(k_params)
    slab, offs = pack_params(params)      # one-time fused packing (hoisted)

    fwd = jax.jit(functools.partial(critic_net_forward, offs=offs))

    # Small demo batch; observations exceed clamp range to exercise the clamp.
    x = jax.random.normal(k_x, (BATCH, STATE_SIZE), dtype=jnp.float32) * 2.0
    a = jax.random.uniform(k_a, (BATCH, ACTION_SIZE), dtype=jnp.float32,
                           minval=-2.0, maxval=2.0)

    q1, q2 = fwd(x, a, slab)
    q1 = jax.block_until_ready(q1)
    q2 = jax.block_until_ready(q2)

    q1_ref, q2_ref = critic_net_reference(x, a, params)
    assert q1.shape == (BATCH, 1) and q2.shape == (BATCH, 1)
    assert jnp.allclose(q1, q1_ref, atol=1e-5, rtol=1e-5), "critic 1 mismatch"
    assert jnp.allclose(q2, q2_ref, atol=1e-5, rtol=1e-5), "critic 2 mismatch"

    # Replay-batch path: 2 parallel grid steps (tb=256) -> both v7x TCs busy.
    kb_x, kb_a = jax.random.split(jax.random.PRNGKey(1))
    xb = jax.random.normal(kb_x, (512, STATE_SIZE), dtype=jnp.float32) * 2.0
    ab = jax.random.uniform(kb_a, (512, ACTION_SIZE), dtype=jnp.float32,
                            minval=-2.0, maxval=2.0)
    q1b, q2b = fwd(xb, ab, slab)
    q1b = jax.block_until_ready(q1b)
    q1b_ref, q2b_ref = critic_net_reference(xb, ab, params)
    assert jnp.allclose(q1b, q1b_ref, atol=1e-5, rtol=1e-5), "batched critic 1 mismatch"
    assert jnp.allclose(q2b, q2b_ref, atol=1e-5, rtol=1e-5), "batched critic 2 mismatch"

    # Unaligned batch: exercises batch padding (garbage rows sliced off).
    kc_x, kc_a = jax.random.split(jax.random.PRNGKey(2))
    xc = jax.random.normal(kc_x, (100, STATE_SIZE), dtype=jnp.float32) * 2.0
    ac = jax.random.uniform(kc_a, (100, ACTION_SIZE), dtype=jnp.float32,
                            minval=-2.0, maxval=2.0)
    q1c, q2c = fwd(xc, ac, slab)
    q1c = jax.block_until_ready(q1c)
    q1c_ref, q2c_ref = critic_net_reference(xc, ac, params)
    assert q1c.shape == (100, 1) and q2c.shape == (100, 1)
    assert jnp.allclose(q1c, q1c_ref, atol=1e-5, rtol=1e-5), "padded critic 1 mismatch"
    assert jnp.allclose(q2c, q2c_ref, atol=1e-5, rtol=1e-5), "padded critic 2 mismatch"

    print("KERNEL_OK")
</pallas_src>

<mosaic_0001>
module attributes {stable_mosaic.version = 11 : i64} {
  func.func @kernel(%arg0: i32, %arg1: memref<8x3xf32, #tpu.memory_space<vmem>>, %arg2: memref<8x1xf32, #tpu.memory_space<vmem>>, %arg3: memref<296x128xf32, #tpu.memory_space<vmem>>, %arg4: memref<8x128xf32, #tpu.memory_space<vmem>>) attributes {dimension_semantics = [#tpu.dimension_semantics<parallel>], iteration_bounds = array<i64: 1>, scalar_prefetch = 0 : i64, scratch_operands = 0 : i64, tpu.core_type = #tpu.core_type<tc>, window_params = [{transform_indices = @transform_0, window_bounds = array<i64: 8, 3>}, {transform_indices = @transform_1, window_bounds = array<i64: 8, 1>}, {pipeline_mode = #tpu.pipeline_mode<synchronous>, transform_indices = @transform_2, window_bounds = array<i64: 296, 128>}, {transform_indices = @transform_3, window_bounds = array<i64: 8, 128>}]} {
    %c0 = arith.constant 0 : index
    %c0_0 = arith.constant 0 : index
    %0 = vector.load %arg1[%c0, %c0_0] : memref<8x3xf32, #tpu.memory_space<vmem>>, vector<8x3xf32>
    %cst = arith.constant -1.100000e+00 : f32
    %cst_1 = arith.constant 1.100000e+00 : f32
    %1 = vector.broadcast %cst : f32 to vector<8x3xf32>
    %2 = arith.maximumf %1, %0 : vector<8x3xf32>
    %3 = vector.broadcast %cst_1 : f32 to vector<8x3xf32>
    %4 = arith.minimumf %3, %2 : vector<8x3xf32>
    %c0_2 = arith.constant 0 : index
    %c0_3 = arith.constant 0 : index
    %5 = vector.load %arg2[%c0_2, %c0_3] : memref<8x1xf32, #tpu.memory_space<vmem>>, vector<8x1xf32>
    %c0_4 = arith.constant 0 : index
    %c0_5 = arith.constant 0 : index
    %6 = vector.load %arg3[%c0_4, %c0_5] : memref<296x128xf32, #tpu.memory_space<vmem>>, vector<3x128xf32>
    %c8 = arith.constant 8 : index
    %c0_6 = arith.constant 0 : index
    %7 = vector.load %arg3[%c8, %c0_6] : memref<296x128xf32, #tpu.memory_space<vmem>>, vector<1x128xf32>
    %c16 = arith.constant 16 : index
    %c0_7 = arith.constant 0 : index
    %8 = vector.load %arg3[%c16, %c0_7] : memref<296x128xf32, #tpu.memory_space<vmem>>, vector<1x128xf32>
    %c24 = arith.constant 24 : index
    %c0_8 = arith.constant 0 : index
    %9 = vector.load %arg3[%c24, %c0_8] : memref<296x128xf32, #tpu.memory_space<vmem>>, vector<128x128xf32>
    %c152 = arith.constant 152 : index
    %c0_9 = arith.constant 0 : index
    %10 = vector.load %arg3[%c152, %c0_9] : memref<296x128xf32, #tpu.memory_space<vmem>>, vector<1x128xf32>
    %c160 = arith.constant 160 : index
    %c0_10 = arith.constant 0 : index
    %11 = vector.load %arg3[%c160, %c0_10] : memref<296x128xf32, #tpu.memory_space<vmem>>, vector<128x128xf32>
    %c288 = arith.constant 288 : index
    %c0_11 = arith.constant 0 : index
    %12 = vector.load %arg3[%c288, %c0_11] : memref<296x128xf32, #tpu.memory_space<vmem>>, vector<1x128xf32>
    %13 = vector.extract_strided_slice %4 {offsets = [0, 0], sizes = [8, 1], strides = [1, 1]} : vector<8x3xf32> to vector<8x1xf32>
    %14 = vector.extract_strided_slice %6 {offsets = [0, 0], sizes = [1, 128], strides = [1, 1]} : vector<3x128xf32> to vector<1x128xf32>
    %15 = vector.broadcast %13 : vector<8x1xf32> to vector<8x128xf32>
    %16 = vector.broadcast %14 : vector<1x128xf32> to vector<8x128xf32>
    %17 = arith.mulf %15, %16 : vector<8x128xf32>
    %18 = vector.broadcast %8 : vector<1x128xf32> to vector<8x128xf32>
    %19 = arith.addf %18, %17 : vector<8x128xf32>
    %20 = vector.extract_strided_slice %4 {offsets = [0, 1], sizes = [8, 1], strides = [1, 1]} : vector<8x3xf32> to vector<8x1xf32>
    %21 = vector.extract_strided_slice %6 {offsets = [1, 0], sizes = [1, 128], strides = [1, 1]} : vector<3x128xf32> to vector<1x128xf32>
    %22 = vector.broadcast %20 : vector<8x1xf32> to vector<8x128xf32>
    %23 = vector.broadcast %21 : vector<1x128xf32> to vector<8x128xf32>
    %24 = arith.mulf %22, %23 : vector<8x128xf32>
    %25 = arith.addf %19, %24 : vector<8x128xf32>
    %26 = vector.extract_strided_slice %4 {offsets = [0, 2], sizes = [8, 1], strides = [1, 1]} : vector<8x3xf32> to vector<8x1xf32>
    %27 = vector.extract_strided_slice %6 {offsets = [2, 0], sizes = [1, 128], strides = [1, 1]} : vector<3x128xf32> to vector<1x128xf32>
    %28 = vector.broadcast %26 : vector<8x1xf32> to vector<8x128xf32>
    %29 = vector.broadcast %27 : vector<1x128xf32> to vector<8x128xf32>
    %30 = arith.mulf %28, %29 : vector<8x128xf32>
    %31 = arith.addf %25, %30 : vector<8x128xf32>
    %32 = vector.broadcast %5 : vector<8x1xf32> to vector<8x128xf32>
    %33 = vector.broadcast %7 : vector<1x128xf32> to vector<8x128xf32>
    %34 = arith.mulf %32, %33 : vector<8x128xf32>
    %35 = arith.addf %31, %34 : vector<8x128xf32>
    %cst_12 = arith.constant 0.000000e+00 : f32
    %36 = vector.broadcast %cst_12 : f32 to vector<8x128xf32>
    %37 = arith.maximumf %35, %36 : vector<8x128xf32>
    %cst_13 = arith.constant dense<0.000000e+00> : vector<8x128xf32>
    %38 = tpu.matmul %37, %9, %cst_13 {dimension_numbers = #tpu.dot_dimension_numbers<[1], [0], [0], [1], [0, 0, 1, 1], [], []>} : vector<8x128xf32>, vector<128x128xf32>, vector<8x128xf32> -> vector<8x128xf32>
    %39 = vector.broadcast %10 : vector<1x128xf32> to vector<8x128xf32>
    %40 = arith.addf %38, %39 : vector<8x128xf32>
    %cst_14 = arith.constant 0.000000e+00 : f32
    %41 = vector.broadcast %cst_14 : f32 to vector<8x128xf32>
    %42 = arith.maximumf %40, %41 : vector<8x128xf32>
    %cst_15 = arith.constant dense<0.000000e+00> : vector<8x128xf32>
    %43 = tpu.matmul %42, %11, %cst_15 {dimension_numbers = #tpu.dot_dimension_numbers<[1], [0], [0], [1], [0, 0, 1, 1], [], []>} : vector<8x128xf32>, vector<128x128xf32>, vector<8x128xf32> -> vector<8x128xf32>
    %44 = vector.broadcast %12 : vector<1x128xf32> to vector<8x128xf32>
    %45 = arith.addf %43, %44 : vector<8x128xf32>
    %c0_16 = arith.constant 0 : index
    %c0_17 = arith.constant 0 : index
    %46 = vector.load %arg4[%c0_16, %c0_17] : memref<8x128xf32, #tpu.memory_space<vmem>>, vector<8x128xf32>
    tpu.vector_store %arg4[%c0_16, %c0_17], %45 {strides = array<i32>} : memref<8x128xf32, #tpu.memory_space<vmem>>, vector<8x128xf32>,
    return
  }
  func.func @transform_0(%arg0: i32) -> (i32, i32) {
    %c0_i32 = arith.constant 0 : i32
    %c0_i32_0 = arith.constant 0 : i32
    return %arg0, %c0_i32 : i32, i32
  }
  func.func @transform_1(%arg0: i32) -> (i32, i32) {
    %c0_i32 = arith.constant 0 : i32
    %c0_i32_0 = arith.constant 0 : i32
    return %arg0, %c0_i32 : i32, i32
  }
  func.func @transform_2(%arg0: i32) -> (i32, i32) {
    %c0_i32 = arith.constant 0 : i32
    %c0_i32_0 = arith.constant 0 : i32
    %c0_i32_1 = arith.constant 0 : i32
    return %c0_i32, %c0_i32_0 : i32, i32
  }
  func.func @transform_3(%arg0: i32) -> (i32, i32) {
    %c0_i32 = arith.constant 0 : i32
    %c0_i32_0 = arith.constant 0 : i32
    return %arg0, %c0_i32 : i32, i32
  }
}

</mosaic_0001>

<llo_original>
// kernel: critic_net_forward.1
$region0: #{critic_net_forward.1}
  #allocation0 [shape = 'u32[]', space=smem, size = 0x4, offset = 0x4, fixed_abs, tag = 'smem constant byte address 0x4 - core index']
  #allocation1 [shape = 'u32[72,128]{1,0:T(1,128)}', space=vmem, size = 0x9000, scoped, tag = 'internal scratch']
  %s0 = inlined_call_operand.vmem [shape: f32[8,3], index: 0, kind: input, shape index: {}]
  %s1 = inlined_call_operand.vmem [shape: f32[8,1], index: 1, kind: input, shape index: {}]
  %s2 = inlined_call_operand.hbm [shape: f32[296,128], index: 2, kind: input, shape index: {}]
  %s3 = inlined_call_operand.vmem [shape: f32[8,128], index: 3, kind: output, shape index: {}]
  %s4 = sld [smem:[#allocation0]]
  $region26: #{critic_net_forward.1} parent=0
    _
  %s6 = ssub.s32 1, %s4
  %s7 = scalar_select 0, %s6, %s4
  $region1: #{critic_net_forward.1} parent=0
    #allocation2 [shape = 'u8[151552]{0}', space=vmem, size = 0x25000, scoped, tag = 'input window, operand 2, single buffered']
    #allocation3 [shape = 's32[1]{0}', space=sflag, size = 0x4, scoped, tag = 'scoped memory for critic_net_forward.1']
    %8 = vsyncpa [#allocation3], 0
    // Predicated region
    $region2: #{critic_net_forward.1} parent=1 // pred_check
      _
    $region3: #{critic_net_forward.1} parent=1 // pred_check_branch
      %10 = sbr.rel (0) target = $region5
    $region4: #{critic_net_forward.1} parent=1 // pred_region
      _
    $region5: #{critic_net_forward.1} parent=1 // pred_fallthru
      _
    // Predicated region
    $region6: #{critic_net_forward.1} parent=1 // pred_check
      _
    $region7: #{critic_net_forward.1} parent=1 // pred_check_branch
      %12 = sbr.rel (0) target = $region9
    $region8: #{critic_net_forward.1} parent=1 // pred_region
      _
    $region9: #{critic_net_forward.1} parent=1 // pred_fallthru
      _
    // Predicated region
    $region10: #{critic_net_forward.1} parent=1 // pred_check
      _
    $region11: #{critic_net_forward.1} parent=1 // pred_check_branch
      %14 = sbr.rel (0) target = $region13
    $region12: #{critic_net_forward.1} parent=1 // pred_region
      %16 = vsyncadd [#allocation3], 0
      %s17 = sshll.u32 %s2, 4
      %s18 = int_to_ptr.hbm [resolvable:$true] %s17
      %s19 = sshll.u32 [#allocation2], 4
      %s20 = int_to_ptr.vmem [resolvable:$true] %s19
      %25 = dma.hbm_to_vmem [thread:$0]  %s18, 4736, %s20, [#allocation3], 128, 128, 8
    $region13: #{critic_net_forward.1} parent=1 // pred_fallthru
      _
    // Predicated region
    $region14: #{critic_net_forward.1} parent=1 // pred_check
      _
    $region15: #{critic_net_forward.1} parent=1 // pred_check_branch
      %27 = sbr.rel (0) target = $region17
    $region16: #{critic_net_forward.1} parent=1 // pred_region
      %29 = dma.done [#allocation3], 4736
    $region17: #{critic_net_forward.1} parent=1 // pred_fallthru
      _
    %v30 = vld [vmem:[%s0] sm:$0xff]
    %v31 = vmax.f32 %v30, -1.1
    %v32 = vmin.f32 %v31, 1.1
    %v33 = vld [vmem:[%s1] sm:$0xff]
    %v34 = vld [vmem:[#allocation2] sm:$0x7]
    %v35 = vld [vmem:[#allocation2 + $0x8] sm:$0x1]
    %v36 = vld [vmem:[#allocation2 + $0x10] sm:$0x1]
    %v37 = vld [vmem:[#allocation2 + $0x18] sm:$0xff]
    %v38 = vld [vmem:[#allocation2 + $0x20] sm:$0xff]
    %v39 = vld [vmem:[#allocation2 + $0x28] sm:$0xff]
    %v40 = vld [vmem:[#allocation2 + $0x30] sm:$0xff]
    %v41 = vld [vmem:[#allocation2 + $0x38] sm:$0xff]
    %v42 = vld [vmem:[#allocation2 + $0x40] sm:$0xff]
    %v43 = vld [vmem:[#allocation2 + $0x48] sm:$0xff]
    %v44 = vld [vmem:[#allocation2 + $0x50] sm:$0xff]
    %v45 = vld [vmem:[#allocation2 + $0x58] sm:$0xff]
    %v46 = vld [vmem:[#allocation2 + $0x60] sm:$0xff]
    %v47 = vld [vmem:[#allocation2 + $0x68] sm:$0xff]
    %v48 = vld [vmem:[#allocation2 + $0x70] sm:$0xff]
    %v49 = vld [vmem:[#allocation2 + $0x78] sm:$0xff]
    %v50 = vld [vmem:[#allocation2 + $0x80] sm:$0xff]
    %v51 = vld [vmem:[#allocation2 + $0x88] sm:$0xff]
    %v52 = vld [vmem:[#allocation2 + $0x90] sm:$0xff]
    %v53 = vld [vmem:[#allocation2 + $0x98] sm:$0x1]
    %v54 = vld [vmem:[#allocation2 + $0xa0] sm:$0xff]
    %v55 = vld [vmem:[#allocation2 + $0xa8] sm:$0xff]
    %v56 = vld [vmem:[#allocation2 + $0xb0] sm:$0xff]
    %v57 = vld [vmem:[#allocation2 + $0xb8] sm:$0xff]
    %v58 = vld [vmem:[#allocation2 + $0xc0] sm:$0xff]
    %v59 = vld [vmem:[#allocation2 + $0xc8] sm:$0xff]
    %v60 = vld [vmem:[#allocation2 + $0xd0] sm:$0xff]
    %v61 = vld [vmem:[#allocation2 + $0xd8] sm:$0xff]
    %v62 = vld [vmem:[#allocation2 + $0xe0] sm:$0xff]
    %v63 = vld [vmem:[#allocation2 + $0xe8] sm:$0xff]
    %v64 = vld [vmem:[#allocation2 + $0xf0] sm:$0xff]
    %v65 = vld [vmem:[#allocation2 + $0xf8] sm:$0xff]
    %v66 = vld [vmem:[#allocation2 + $0x100] sm:$0xff]
    %v67 = vld [vmem:[#allocation2 + $0x108] sm:$0xff]
    %v68 = vld [vmem:[#allocation2 + $0x110] sm:$0xff]
    %v69 = vld [vmem:[#allocation2 + $0x118] sm:$0xff]
    %v70 = vld [vmem:[#allocation2 + $0x120] sm:$0x1]
    %72 = vset.pattern.permute.xlu0 0
    %73 = vperm.xlu0 %72, %v32
    %v74 = vpop.permute.xlu0 %73
    %v76 = vperm.slane %v34, 0
    %v77 = vmul.f32 %v74, %v76
    %v78 = vperm.slane %v36, 0
    %v79 = vadd.f32 %v78, %v77
    %80 = vset.pattern.permute.xlu0 1
    %81 = vperm.xlu0 %80, %v32
    %v82 = vpop.permute.xlu0 %81
    %v84 = vperm.slane %v34, 1
    %v85 = vmul.f32 %v82, %v84
    %v86 = vadd.f32 %v79, %v85
    %87 = vset.pattern.permute.xlu0 2
    %88 = vperm.xlu0 %87, %v32
    %v89 = vpop.permute.xlu0 %88
    %v91 = vperm.slane %v34, 2
    %v92 = vmul.f32 %v89, %v91
    %v93 = vadd.f32 %v86, %v92
    %95 = vset.pattern.permute.xlu0 0
    %96 = vperm.xlu0 %95, %v33
    %v97 = vpop.permute.xlu0 %96
    %v99 = vperm.slane %v35, 0
    %v100 = vmul.f32 %v97, %v99
    %v101 = vadd.f32 %v93, %v100
    %v102 = vmax.f32 %v101, 0.0
    %v103 = vperm.slane %v53, 0
    %104 = vmatpush.msra.mxu0 %v52
    %105 = vmatpush.msra.mxu0 %v51
    %106 = vmatpush.msra.mxu0 %v50
    %107 = vmatpush.msra.mxu0 %v49
    %108 = vmatpush.msra.mxu0 %v48
    %109 = vmatpush.msra.mxu0 %v47
    %110 = vmatpush.msra.mxu0 %v46
    %111 = vmatpush.msra.mxu0 %v45
    %112 = vmatpush.msra.mxu0 %v44
    %113 = vmatpush.msra.mxu0 %v43
    %114 = vmatpush.msra.mxu0 %v42
    %115 = vmatpush.msra.mxu0 %v41
    %116 = vmatpush.msra.mxu0 %v40
    %117 = vmatpush.msra.mxu0 %v39
    %118 = vmatpush.msra.mxu0 %v38
    %119 = vmatpush.msra.mxu0 %v37
    %120 = vmatmul.f32.gmra.mxu0 %v102
    %v121 = vpop.f32.mrf.mxu0
    %v122 = vadd.f32 %v103, %v121
    %123 = vdwg.mxu0
    %v124 = vmax.f32 %v122, 0.0
    %v125 = vperm.slane %v70, 0
    %126 = vmatpush.msra.mxu0 %v69
    %127 = vmatpush.msra.mxu0 %v68
    %128 = vmatpush.msra.mxu0 %v67
    %129 = vmatpush.msra.mxu0 %v66
    %130 = vmatpush.msra.mxu0 %v65
    %131 = vmatpush.msra.mxu0 %v64
    %132 = vmatpush.msra.mxu0 %v63
    %133 = vmatpush.msra.mxu0 %v62
    %134 = vmatpush.msra.mxu0 %v61
    %135 = vmatpush.msra.mxu0 %v60
    %136 = vmatpush.msra.mxu0 %v59
    %137 = vmatpush.msra.mxu0 %v58
    %138 = vmatpush.msra.mxu0 %v57
    %139 = vmatpush.msra.mxu0 %v56
    %140 = vmatpush.msra.mxu0 %v55
    %141 = vmatpush.msra.mxu0 %v54
    %142 = vmatmul.f32.gmra.mxu0 %v124
    %v143 = vpop.f32.mrf.mxu0
    %v144 = vadd.f32 %v125, %v143
    %145 = vdwg.mxu0
    %146 = vst [vmem:[%s3] sm:$0xff] %v144
    // Predicated region
    $region18: #{critic_net_forward.1} parent=1 // pred_check
      _
    $region19: #{critic_net_forward.1} parent=1 // pred_check_branch
      %148 = sbr.rel (0) target = $region21
    $region20: #{critic_net_forward.1} parent=1 // pred_region
      _
    $region21: #{critic_net_forward.1} parent=1 // pred_fallthru
      _
    // Predicated region
    $region22: #{critic_net_forward.1} parent=1 // pred_check
      _
    $region23: #{critic_net_forward.1} parent=1 // pred_check_branch
      %150 = sbr.rel (0) target = $region25
    $region24: #{critic_net_forward.1} parent=1 // pred_region
      _
    $region25: #{critic_net_forward.1} parent=1 // pred_fallthru
      _
    %151 = vsyncpa [#allocation3], 1

</llo_original>
